<compile_context>
chip_gen: v7x
topology: tpu7x:2x2x1
jax: 0.10.0
libtpu: 0.0.40
codegen_flags: <defaults>
</compile_context>

<pallas_src>
import functools

import jax
import jax.numpy as jnp
import numpy as np
from jax.experimental import pallas as pl
from jax.experimental.pallas import tpu as pltpu


def _round_up(n, m):
    return (n + m - 1) // m * m


def _se_kernel(x_ref, w1t_ref, w2t_ref, o_ref, *, inv_hw):
    """One block of Bt batch elements per grid step.

    x_ref   : (Bt, C, HWp) VMEM  (HWp = H*W padded to a lane multiple, zero-filled)
    w1t_ref : (C, Ch)      VMEM  (transposed fc1 weight)
    w2t_ref : (Ch, C)      VMEM  (transposed fc2 weight)
    o_ref   : (Bt, C, HWp) VMEM
    """
    # squeeze: global average pool over the spatial (lane) axis.
    # Padded lanes are zero, so sum is exact; divide by the TRUE H*W.
    pooled = jnp.sum(x_ref[...], axis=-1) * inv_hw                 # (Bt, C)

    # excitation: Linear -> ReLU -> Linear -> Sigmoid (Bt rows -> real MXU shapes)
    h = jnp.dot(pooled, w1t_ref[...],
                preferred_element_type=jnp.float32)                # (Bt, Ch)
    h = jnp.maximum(h, 0.0)
    g = jnp.dot(h, w2t_ref[...],
                preferred_element_type=jnp.float32)                # (Bt, C)
    g = jax.nn.sigmoid(g)

    # scale: re-read x from VMEM (cheap vld) instead of holding a huge live range,
    # broadcast the per-channel gate over the spatial lanes.
    o_ref[...] = x_ref[...] * g[:, :, None]


@jax.jit
def se_attention(x_nchw, w1, w2):
    """x_nchw: (B, C, H, W) f32; w1: (Ch, C); w2: (C, Ch)  (PyTorch Linear layout)."""
    B, C, H, W = x_nchw.shape
    Ch = w1.shape[0]
    HW = H * W
    HW_pad = _round_up(HW, 128)          # lane-dense last dim (unmasked vst)

    x3 = x_nchw.reshape(B, C, HW)        # glue: NCHW -> (B, C, H*W)
    if HW_pad != HW:
        x3 = jnp.pad(x3, ((0, 0), (0, 0), (0, HW_pad - HW)))

    # ---- block sizing: pack Bt batch elements per grid step ----
    # Double-buffered input + output blocks ~= 4 * block_bytes; keep under a
    # budget that is safe even on v7x (64 MiB physical VMEM per TC).
    bytes_per_batch = C * HW_pad * 4                       # f32 block row
    vmem_block_budget = 40 * 1024 * 1024
    bt_max = max(1, vmem_block_budget // (4 * bytes_per_batch))
    Bt = min(B, bt_max)
    # TODO(synk): for shapes where a single (1, C, HW_pad) slab exceeds the v7x
    # budget, switch to an HW-tiled two-phase (pool-then-scale) design.

    B_pad = _round_up(B, Bt)
    if B_pad != B:
        # zero-pad batch; padded rows produce zeros and are sliced off below.
        x3 = jnp.pad(x3, ((0, B_pad - B), (0, 0), (0, 0)))

    w1t = w1.T                            # (C, Ch)
    w2t = w2.T                            # (Ch, C)

    kernel = functools.partial(_se_kernel, inv_hw=float(1.0 / HW))

    out3 = pl.pallas_call(
        kernel,
        out_shape=jax.ShapeDtypeStruct((B_pad, C, HW_pad), x3.dtype),
        grid_spec=pltpu.PrefetchScalarGridSpec(
            num_scalar_prefetch=0,
            grid=(B_pad // Bt,),
            in_specs=[
                pl.BlockSpec((Bt, C, HW_pad), lambda b: (b, 0, 0)),
                pl.BlockSpec((C, Ch), lambda b: (0, 0)),
                pl.BlockSpec((Ch, C), lambda b: (0, 0)),
            ],
            out_specs=pl.BlockSpec((Bt, C, HW_pad), lambda b: (b, 0, 0)),
        ),
        compiler_params=pltpu.CompilerParams(
            dimension_semantics=("parallel",),
            # Raise scoped VMEM above the 16/32 MiB defaults so large batched
            # blocks can double-buffer; 48 MiB still leaves headroom on v7x.
            vmem_limit_bytes=48 * 1024 * 1024,
        ),
    )(x3, w1t, w2t)

    out3 = out3[:B, :, :HW]
    return out3.reshape(B, C, H, W)


def _reference(x, w1, w2):
    """Pure-JAX reference mirroring the PyTorch forward."""
    pooled = jnp.mean(x, axis=(2, 3))                    # (B, C)
    h = jnp.maximum(pooled @ w1.T, 0.0)                  # (B, Ch)
    g = jax.nn.sigmoid(h @ w2.T)                         # (B, C)
    return x * g[:, :, None, None]


if __name__ == "__main__":
    # Small shapes consistent with the module: channel=128, reduction=16 -> hidden=8.
    B, C, H, W = 2, 128, 16, 16
    reduction = 16
    Ch = C // reduction

    key = jax.random.PRNGKey(0)
    kx, k1, k2 = jax.random.split(key, 3)

    x = jax.random.normal(kx, (B, C, H, W), dtype=jnp.float32)
    # Deterministic synthetic Linear weights (bias-free, PyTorch (out, in) layout).
    w1 = 0.05 * jax.random.normal(k1, (Ch, C), dtype=jnp.float32)
    w2 = 0.05 * jax.random.normal(k2, (C, Ch), dtype=jnp.float32)

    out = se_attention(x, w1, w2)
    out = jax.block_until_ready(out)

    ref = jax.block_until_ready(_reference(x, w1, w2))
    np.testing.assert_allclose(np.asarray(out), np.asarray(ref), rtol=1e-5, atol=1e-5)

    print("KERNEL_OK")
</pallas_src>

<mosaic_0001>
module attributes {stable_mosaic.version = 11 : i64} {
  func.func @_se_kernel(%arg0: i32, %arg1: memref<2x128x256xf32, #tpu.memory_space<vmem>>, %arg2: memref<128x8xf32, #tpu.memory_space<vmem>>, %arg3: memref<8x128xf32, #tpu.memory_space<vmem>>, %arg4: memref<2x128x256xf32, #tpu.memory_space<vmem>>) attributes {dimension_semantics = [#tpu.dimension_semantics<parallel>], iteration_bounds = array<i64: 1>, scalar_prefetch = 0 : i64, scratch_operands = 0 : i64, tpu.core_type = #tpu.core_type<tc>, window_params = [{transform_indices = @transform_0, window_bounds = array<i64: 2, 128, 256>}, {pipeline_mode = #tpu.pipeline_mode<synchronous>, transform_indices = @transform_1, window_bounds = array<i64: 128, 8>}, {pipeline_mode = #tpu.pipeline_mode<synchronous>, transform_indices = @transform_2, window_bounds = array<i64: 8, 128>}, {transform_indices = @transform_3, window_bounds = array<i64: 2, 128, 256>}]} {
    %c0 = arith.constant 0 : index
    %c0_0 = arith.constant 0 : index
    %c0_1 = arith.constant 0 : index
    %0 = vector.load %arg1[%c0, %c0_0, %c0_1] : memref<2x128x256xf32, #tpu.memory_space<vmem>>, vector<2x128x256xf32>
    %cst = arith.constant dense<0.000000e+00> : vector<2x128xf32>
    %1 = vector.multi_reduction <add>, %0, %cst [2] : vector<2x128x256xf32> to vector<2x128xf32>
    %cst_2 = arith.constant 3.906250e-03 : f32
    %2 = vector.broadcast %cst_2 : f32 to vector<2x128xf32>
    %3 = arith.mulf %1, %2 : vector<2x128xf32>
    %c0_3 = arith.constant 0 : index
    %c0_4 = arith.constant 0 : index
    %4 = vector.load %arg2[%c0_3, %c0_4] : memref<128x8xf32, #tpu.memory_space<vmem>>, vector<128x8xf32>
    %cst_5 = arith.constant dense<0.000000e+00> : vector<2x8xf32>
    %5 = tpu.matmul %3, %4, %cst_5 {dimension_numbers = #tpu.dot_dimension_numbers<[1], [0], [0], [1], [0, 0, 1, 1], [], []>} : vector<2x128xf32>, vector<128x8xf32>, vector<2x8xf32> -> vector<2x8xf32>
    %cst_6 = arith.constant 0.000000e+00 : f32
    %6 = vector.broadcast %cst_6 : f32 to vector<2x8xf32>
    %7 = arith.maximumf %5, %6 : vector<2x8xf32>
    %c0_7 = arith.constant 0 : index
    %c0_8 = arith.constant 0 : index
    %8 = vector.load %arg3[%c0_7, %c0_8] : memref<8x128xf32, #tpu.memory_space<vmem>>, vector<8x128xf32>
    %cst_9 = arith.constant dense<0.000000e+00> : vector<2x128xf32>
    %9 = tpu.matmul %7, %8, %cst_9 {dimension_numbers = #tpu.dot_dimension_numbers<[1], [0], [0], [1], [0, 0, 1, 1], [], []>} : vector<2x8xf32>, vector<8x128xf32>, vector<2x128xf32> -> vector<2x128xf32>
    %10 = arith.negf %9 : vector<2x128xf32>
    %11 = math.exp %10 : vector<2x128xf32>
    %cst_10 = arith.constant 1.000000e+00 : f32
    %12 = vector.broadcast %cst_10 : f32 to vector<2x128xf32>
    %13 = arith.addf %12, %11 : vector<2x128xf32>
    %14 = arith.divf %12, %13 : vector<2x128xf32>
    %c0_11 = arith.constant 0 : index
    %c0_12 = arith.constant 0 : index
    %c0_13 = arith.constant 0 : index
    %15 = vector.load %arg1[%c0_11, %c0_12, %c0_13] : memref<2x128x256xf32, #tpu.memory_space<vmem>>, vector<2x128x256xf32>
    %16 = vector.shape_cast %14 : vector<2x128xf32> to vector<2x128x1xf32>
    %17 = vector.broadcast %16 : vector<2x128x1xf32> to vector<2x128x256xf32>
    %18 = arith.mulf %15, %17 : vector<2x128x256xf32>
    %c0_14 = arith.constant 0 : index
    %c0_15 = arith.constant 0 : index
    %c0_16 = arith.constant 0 : index
    %19 = vector.load %arg4[%c0_14, %c0_15, %c0_16] : memref<2x128x256xf32, #tpu.memory_space<vmem>>, vector<2x128x256xf32>
    tpu.vector_store %arg4[%c0_14, %c0_15, %c0_16], %18 {strides = array<i32>} : memref<2x128x256xf32, #tpu.memory_space<vmem>>, vector<2x128x256xf32>,
    return
  }
  func.func @transform_0(%arg0: i32) -> (i32, i32, i32) {
    %c0_i32 = arith.constant 0 : i32
    %c0_i32_0 = arith.constant 0 : i32
    %c0_i32_1 = arith.constant 0 : i32
    return %arg0, %c0_i32, %c0_i32_0 : i32, i32, i32
  }
  func.func @transform_1(%arg0: i32) -> (i32, i32) {
    %c0_i32 = arith.constant 0 : i32
    %c0_i32_0 = arith.constant 0 : i32
    %c0_i32_1 = arith.constant 0 : i32
    return %c0_i32, %c0_i32_0 : i32, i32
  }
  func.func @transform_2(%arg0: i32) -> (i32, i32) {
    %c0_i32 = arith.constant 0 : i32
    %c0_i32_0 = arith.constant 0 : i32
    %c0_i32_1 = arith.constant 0 : i32
    return %c0_i32, %c0_i32_0 : i32, i32
  }
  func.func @transform_3(%arg0: i32) -> (i32, i32, i32) {
    %c0_i32 = arith.constant 0 : i32
    %c0_i32_0 = arith.constant 0 : i32
    %c0_i32_1 = arith.constant 0 : i32
    return %arg0, %c0_i32, %c0_i32_0 : i32, i32, i32
  }
}

</mosaic_0001>

<llo_original>
// kernel: se_attention.1
$region0: #{se_attention.1}
  #allocation0 [shape = 'u32[]', space=smem, size = 0x4, offset = 0x4, fixed_abs, tag = 'smem constant byte address 0x4 - core index']
  #allocation1 [shape = 'u32[144,128]{1,0:T(1,128)}', space=vmem, size = 0x12000, scoped, tag = 'internal scratch']
  %s0 = inlined_call_operand.vmem [shape: f32[2,128,256], index: 0, kind: input, shape index: {}]
  %s1 = inlined_call_operand.vmem [shape: f32[128,8], index: 1, kind: input, shape index: {}]
  %s2 = inlined_call_operand.vmem [shape: f32[8,128], index: 2, kind: input, shape index: {}]
  %s3 = inlined_call_operand.vmem [shape: f32[2,128,256], index: 3, kind: output, shape index: {}]
  %s4 = sld [smem:[#allocation0]]
  $region22: #{se_attention.1} parent=0
    _
  %s6 = ssub.s32 1, %s4
  %s7 = scalar_select 0, %s6, %s4
  // Predicated region
  $region2: #{se_attention.1} parent=0 // pred_check
    _
  $region3: #{se_attention.1} parent=0 // pred_check_branch
    %9 = sbr.rel (0) target = $region5
  $region4: #{se_attention.1} parent=0 // pred_region
    _
  $region5: #{se_attention.1} parent=0 // pred_fallthru
    _
  // Predicated region
  $region6: #{se_attention.1} parent=0 // pred_check
    _
  $region7: #{se_attention.1} parent=0 // pred_check_branch
    %11 = sbr.rel (0) target = $region9
  $region8: #{se_attention.1} parent=0 // pred_region
    _
  $region9: #{se_attention.1} parent=0 // pred_fallthru
    _
  // Predicated region
  $region10: #{se_attention.1} parent=0 // pred_check
    _
  $region11: #{se_attention.1} parent=0 // pred_check_branch
    %13 = sbr.rel (0) target = $region13
  $region12: #{se_attention.1} parent=0 // pred_region
    _
  $region13: #{se_attention.1} parent=0 // pred_fallthru
    _
  %v14 = vld [vmem:[%s0] sm:$0xff]
  %v15 = vld [vmem:[%s0 + $0x8] sm:$0xff]
  %v16 = vld [vmem:[%s0 + $0x10] sm:$0xff]
  %v17 = vld [vmem:[%s0 + $0x18] sm:$0xff]
  %v18 = vld [vmem:[%s0 + $0x20] sm:$0xff]
  %v19 = vld [vmem:[%s0 + $0x28] sm:$0xff]
  %v20 = vld [vmem:[%s0 + $0x30] sm:$0xff]
  %v21 = vld [vmem:[%s0 + $0x38] sm:$0xff]
  %v22 = vld [vmem:[%s0 + $0x40] sm:$0xff]
  %v23 = vld [vmem:[%s0 + $0x48] sm:$0xff]
  %v24 = vld [vmem:[%s0 + $0x50] sm:$0xff]
  %v25 = vld [vmem:[%s0 + $0x58] sm:$0xff]
  %v26 = vld [vmem:[%s0 + $0x60] sm:$0xff]
  %v27 = vld [vmem:[%s0 + $0x68] sm:$0xff]
  %v28 = vld [vmem:[%s0 + $0x70] sm:$0xff]
  %v29 = vld [vmem:[%s0 + $0x78] sm:$0xff]
  %v30 = vld [vmem:[%s0 + $0x80] sm:$0xff]
  %v31 = vld [vmem:[%s0 + $0x88] sm:$0xff]
  %v32 = vld [vmem:[%s0 + $0x90] sm:$0xff]
  %v33 = vld [vmem:[%s0 + $0x98] sm:$0xff]
  %v34 = vld [vmem:[%s0 + $0xa0] sm:$0xff]
  %v35 = vld [vmem:[%s0 + $0xa8] sm:$0xff]
  %v36 = vld [vmem:[%s0 + $0xb0] sm:$0xff]
  %v37 = vld [vmem:[%s0 + $0xb8] sm:$0xff]
  %v38 = vld [vmem:[%s0 + $0xc0] sm:$0xff]
  %v39 = vld [vmem:[%s0 + $0xc8] sm:$0xff]
  %v40 = vld [vmem:[%s0 + $0xd0] sm:$0xff]
  %v41 = vld [vmem:[%s0 + $0xd8] sm:$0xff]
  %v42 = vld [vmem:[%s0 + $0xe0] sm:$0xff]
  %v43 = vld [vmem:[%s0 + $0xe8] sm:$0xff]
  %v44 = vld [vmem:[%s0 + $0xf0] sm:$0xff]
  %v45 = vld [vmem:[%s0 + $0xf8] sm:$0xff]
  %v46 = vld [vmem:[%s0 + $0x100] sm:$0xff]
  %v47 = vld [vmem:[%s0 + $0x108] sm:$0xff]
  %v48 = vld [vmem:[%s0 + $0x110] sm:$0xff]
  %v49 = vld [vmem:[%s0 + $0x118] sm:$0xff]
  %v50 = vld [vmem:[%s0 + $0x120] sm:$0xff]
  %v51 = vld [vmem:[%s0 + $0x128] sm:$0xff]
  %v52 = vld [vmem:[%s0 + $0x130] sm:$0xff]
  %v53 = vld [vmem:[%s0 + $0x138] sm:$0xff]
  %v54 = vld [vmem:[%s0 + $0x140] sm:$0xff]
  %v55 = vld [vmem:[%s0 + $0x148] sm:$0xff]
  %v56 = vld [vmem:[%s0 + $0x150] sm:$0xff]
  %v57 = vld [vmem:[%s0 + $0x158] sm:$0xff]
  %v58 = vld [vmem:[%s0 + $0x160] sm:$0xff]
  %v59 = vld [vmem:[%s0 + $0x168] sm:$0xff]
  %v60 = vld [vmem:[%s0 + $0x170] sm:$0xff]
  %v61 = vld [vmem:[%s0 + $0x178] sm:$0xff]
  %v62 = vld [vmem:[%s0 + $0x180] sm:$0xff]
  %v63 = vld [vmem:[%s0 + $0x188] sm:$0xff]
  %v64 = vld [vmem:[%s0 + $0x190] sm:$0xff]
  %v65 = vld [vmem:[%s0 + $0x198] sm:$0xff]
  %v66 = vld [vmem:[%s0 + $0x1a0] sm:$0xff]
  %v67 = vld [vmem:[%s0 + $0x1a8] sm:$0xff]
  %v68 = vld [vmem:[%s0 + $0x1b0] sm:$0xff]
  %v69 = vld [vmem:[%s0 + $0x1b8] sm:$0xff]
  %v70 = vld [vmem:[%s0 + $0x1c0] sm:$0xff]
  %v71 = vld [vmem:[%s0 + $0x1c8] sm:$0xff]
  %v72 = vld [vmem:[%s0 + $0x1d0] sm:$0xff]
  %v73 = vld [vmem:[%s0 + $0x1d8] sm:$0xff]
  %v74 = vld [vmem:[%s0 + $0x1e0] sm:$0xff]
  %v75 = vld [vmem:[%s0 + $0x1e8] sm:$0xff]
  %v76 = vld [vmem:[%s0 + $0x1f0] sm:$0xff]
  %v77 = vld [vmem:[%s0 + $0x1f8] sm:$0xff]
  %v78 = vadd.f32 %v14, %v15
  %79 = vadd.xlane.f32.xlu0 %v78
  %v80 = vpop.xlane.xlu0 %79
  %v81 = vadd.f32 %v16, %v17
  %82 = vadd.xlane.f32.xlu0 %v81
  %v83 = vpop.xlane.xlu0 %82
  %v84 = vadd.f32 %v18, %v19
  %85 = vadd.xlane.f32.xlu0 %v84
  %v86 = vpop.xlane.xlu0 %85
  %v87 = vadd.f32 %v20, %v21
  %88 = vadd.xlane.f32.xlu0 %v87
  %v89 = vpop.xlane.xlu0 %88
  %v90 = vadd.f32 %v22, %v23
  %91 = vadd.xlane.f32.xlu0 %v90
  %v92 = vpop.xlane.xlu0 %91
  %v93 = vadd.f32 %v24, %v25
  %94 = vadd.xlane.f32.xlu0 %v93
  %v95 = vpop.xlane.xlu0 %94
  %v96 = vadd.f32 %v26, %v27
  %97 = vadd.xlane.f32.xlu0 %v96
  %v98 = vpop.xlane.xlu0 %97
  %v99 = vadd.f32 %v28, %v29
  %100 = vadd.xlane.f32.xlu0 %v99
  %v101 = vpop.xlane.xlu0 %100
  %v102 = vadd.f32 %v30, %v31
  %103 = vadd.xlane.f32.xlu0 %v102
  %v104 = vpop.xlane.xlu0 %103
  %v105 = vadd.f32 %v32, %v33
  %106 = vadd.xlane.f32.xlu0 %v105
  %v107 = vpop.xlane.xlu0 %106
  %v108 = vadd.f32 %v34, %v35
  %109 = vadd.xlane.f32.xlu0 %v108
  %v110 = vpop.xlane.xlu0 %109
  %v111 = vadd.f32 %v36, %v37
  %112 = vadd.xlane.f32.xlu0 %v111
  %v113 = vpop.xlane.xlu0 %112
  %v114 = vadd.f32 %v38, %v39
  %115 = vadd.xlane.f32.xlu0 %v114
  %v116 = vpop.xlane.xlu0 %115
  %v117 = vadd.f32 %v40, %v41
  %118 = vadd.xlane.f32.xlu0 %v117
  %v119 = vpop.xlane.xlu0 %118
  %v120 = vadd.f32 %v42, %v43
  %121 = vadd.xlane.f32.xlu0 %v120
  %v122 = vpop.xlane.xlu0 %121
  %v123 = vadd.f32 %v44, %v45
  %124 = vadd.xlane.f32.xlu0 %v123
  %v125 = vpop.xlane.xlu0 %124
  %v126 = vadd.f32 %v46, %v47
  %127 = vadd.xlane.f32.xlu0 %v126
  %v128 = vpop.xlane.xlu0 %127
  %v129 = vadd.f32 %v48, %v49
  %130 = vadd.xlane.f32.xlu0 %v129
  %v131 = vpop.xlane.xlu0 %130
  %v132 = vadd.f32 %v50, %v51
  %133 = vadd.xlane.f32.xlu0 %v132
  %v134 = vpop.xlane.xlu0 %133
  %v135 = vadd.f32 %v52, %v53
  %136 = vadd.xlane.f32.xlu0 %v135
  %v137 = vpop.xlane.xlu0 %136
  %v138 = vadd.f32 %v54, %v55
  %139 = vadd.xlane.f32.xlu0 %v138
  %v140 = vpop.xlane.xlu0 %139
  %v141 = vadd.f32 %v56, %v57
  %142 = vadd.xlane.f32.xlu0 %v141
  %v143 = vpop.xlane.xlu0 %142
  %v144 = vadd.f32 %v58, %v59
  %145 = vadd.xlane.f32.xlu0 %v144
  %v146 = vpop.xlane.xlu0 %145
  %v147 = vadd.f32 %v60, %v61
  %148 = vadd.xlane.f32.xlu0 %v147
  %v149 = vpop.xlane.xlu0 %148
  %v150 = vadd.f32 %v62, %v63
  %151 = vadd.xlane.f32.xlu0 %v150
  %v152 = vpop.xlane.xlu0 %151
  %v153 = vadd.f32 %v64, %v65
  %154 = vadd.xlane.f32.xlu0 %v153
  %v155 = vpop.xlane.xlu0 %154
  %v156 = vadd.f32 %v66, %v67
  %157 = vadd.xlane.f32.xlu0 %v156
  %v158 = vpop.xlane.xlu0 %157
  %v159 = vadd.f32 %v68, %v69
  %160 = vadd.xlane.f32.xlu0 %v159
  %v161 = vpop.xlane.xlu0 %160
  %v162 = vadd.f32 %v70, %v71
  %163 = vadd.xlane.f32.xlu0 %v162
  %v164 = vpop.xlane.xlu0 %163
  %v165 = vadd.f32 %v72, %v73
  %166 = vadd.xlane.f32.xlu0 %v165
  %v167 = vpop.xlane.xlu0 %166
  %v168 = vadd.f32 %v74, %v75
  %169 = vadd.xlane.f32.xlu0 %v168
  %v170 = vpop.xlane.xlu0 %169
  %v171 = vadd.f32 %v76, %v77
  %172 = vadd.xlane.f32.xlu0 %v171
  %v173 = vpop.xlane.xlu0 %172
  %v174 = vmul.f32 %v80, 0.00390625
  %v175 = vmul.f32 %v83, 0.00390625
  %v176 = vmul.f32 %v86, 0.00390625
  %v177 = vmul.f32 %v89, 0.00390625
  %v178 = vmul.f32 %v92, 0.00390625
  %v179 = vmul.f32 %v95, 0.00390625
  %v180 = vmul.f32 %v98, 0.00390625
  %v181 = vmul.f32 %v101, 0.00390625
  %v182 = vmul.f32 %v104, 0.00390625
  %v183 = vmul.f32 %v107, 0.00390625
  %v184 = vmul.f32 %v110, 0.00390625
  %v185 = vmul.f32 %v113, 0.00390625
  %v186 = vmul.f32 %v116, 0.00390625
  %v187 = vmul.f32 %v119, 0.00390625
  %v188 = vmul.f32 %v122, 0.00390625
  %v189 = vmul.f32 %v125, 0.00390625
  %v190 = vmul.f32 %v128, 0.00390625
  %v191 = vmul.f32 %v131, 0.00390625
  %v192 = vmul.f32 %v134, 0.00390625
  %v193 = vmul.f32 %v137, 0.00390625
  %v194 = vmul.f32 %v140, 0.00390625
  %v195 = vmul.f32 %v143, 0.00390625
  %v196 = vmul.f32 %v146, 0.00390625
  %v197 = vmul.f32 %v149, 0.00390625
  %v198 = vmul.f32 %v152, 0.00390625
  %v199 = vmul.f32 %v155, 0.00390625
  %v200 = vmul.f32 %v158, 0.00390625
  %v201 = vmul.f32 %v161, 0.00390625
  %v202 = vmul.f32 %v164, 0.00390625
  %v203 = vmul.f32 %v167, 0.00390625
  %v204 = vmul.f32 %v170, 0.00390625
  %v205 = vmul.f32 %v173, 0.00390625
  %v206 = vld [vmem:[%s1] sm:$0xff]
  %v207 = vld [vmem:[%s1 + $0x8] sm:$0xff]
  %v208 = vld [vmem:[%s1 + $0x10] sm:$0xff]
  %v209 = vld [vmem:[%s1 + $0x18] sm:$0xff]
  %v210 = vld [vmem:[%s1 + $0x20] sm:$0xff]
  %v211 = vld [vmem:[%s1 + $0x28] sm:$0xff]
  %v212 = vld [vmem:[%s1 + $0x30] sm:$0xff]
  %v213 = vld [vmem:[%s1 + $0x38] sm:$0xff]
  %v214 = vld [vmem:[%s1 + $0x40] sm:$0xff]
  %v215 = vld [vmem:[%s1 + $0x48] sm:$0xff]
  %v216 = vld [vmem:[%s1 + $0x50] sm:$0xff]
  %v217 = vld [vmem:[%s1 + $0x58] sm:$0xff]
  %v218 = vld [vmem:[%s1 + $0x60] sm:$0xff]
  %v219 = vld [vmem:[%s1 + $0x68] sm:$0xff]
  %v220 = vld [vmem:[%s1 + $0x70] sm:$0xff]
  %v221 = vld [vmem:[%s1 + $0x78] sm:$0xff]
  %v254 = vlaneseq
  %v255 = vand.u32 %v254, 127
  %v256 = vlaneseq
  %v257 = vshrl.u32 %v256, 7
  %v258 = vsub.s32 %v255, %v257
  %v259 = vrot.slane %v174, %v258
  %v260 = vadd.s32 %v255, 4294967288
  %v261 = vlaneseq
  %v262 = vshrl.u32 %v261, 7
  %v263 = vsub.s32 %v260, %v262
  %v264 = vrot.slane %v175, %v263
  %vm265 = vcmask 130112
  %v266 = vsel %vm265, %v264, %v259
  %v267 = vadd.s32 %v255, 4294967280
  %v268 = vlaneseq
  %v269 = vshrl.u32 %v268, 7
  %v270 = vsub.s32 %v267, %v269
  %v271 = vrot.slane %v176, %v270
  %vm272 = vcmask 195712
  %v273 = vsel %vm272, %v271, %v266
  %v274 = vadd.s32 %v255, 4294967272
  %v275 = vlaneseq
  %v276 = vshrl.u32 %v275, 7
  %v277 = vsub.s32 %v274, %v276
  %v278 = vrot.slane %v177, %v277
  %vm279 = vcmask 261312
  %v280 = vsel %vm279, %v278, %v273
  %v281 = vadd.s32 %v255, 4294967264
  %v282 = vlaneseq
  %v283 = vshrl.u32 %v282, 7
  %v284 = vsub.s32 %v281, %v283
  %v285 = vrot.slane %v178, %v284
  %vm286 = vcmask 326912
  %v287 = vsel %vm286, %v285, %v280
  %v288 = vadd.s32 %v255, 4294967256
  %v289 = vlaneseq
  %v290 = vshrl.u32 %v289, 7
  %v291 = vsub.s32 %v288, %v290
  %v292 = vrot.slane %v179, %v291
  %vm293 = vcmask 392512
  %v294 = vsel %vm293, %v292, %v287
  %v295 = vadd.s32 %v255, 4294967248
  %v296 = vlaneseq
  %v297 = vshrl.u32 %v296, 7
  %v298 = vsub.s32 %v295, %v297
  %v299 = vrot.slane %v180, %v298
  %vm300 = vcmask 458112
  %v301 = vsel %vm300, %v299, %v294
  %v302 = vadd.s32 %v255, 4294967240
  %v303 = vlaneseq
  %v304 = vshrl.u32 %v303, 7
  %v305 = vsub.s32 %v302, %v304
  %v306 = vrot.slane %v181, %v305
  %vm307 = vcmask 523712
  %v308 = vsel %vm307, %v306, %v301
  %v309 = vadd.s32 %v255, 4294967232
  %v310 = vlaneseq
  %v311 = vshrl.u32 %v310, 7
  %v312 = vsub.s32 %v309, %v311
  %v313 = vrot.slane %v182, %v312
  %vm314 = vcmask 589312
  %v315 = vsel %vm314, %v313, %v308
  %v316 = vadd.s32 %v255, 4294967224
  %v317 = vlaneseq
  %v318 = vshrl.u32 %v317, 7
  %v319 = vsub.s32 %v316, %v318
  %v320 = vrot.slane %v183, %v319
  %vm321 = vcmask 654912
  %v322 = vsel %vm321, %v320, %v315
  %v323 = vadd.s32 %v255, 4294967216
  %v324 = vlaneseq
  %v325 = vshrl.u32 %v324, 7
  %v326 = vsub.s32 %v323, %v325
  %v327 = vrot.slane %v184, %v326
  %vm328 = vcmask 720512
  %v329 = vsel %vm328, %v327, %v322
  %v330 = vadd.s32 %v255, 4294967208
  %v331 = vlaneseq
  %v332 = vshrl.u32 %v331, 7
  %v333 = vsub.s32 %v330, %v332
  %v334 = vrot.slane %v185, %v333
  %vm335 = vcmask 786112
  %v336 = vsel %vm335, %v334, %v329
  %v337 = vadd.s32 %v255, 4294967200
  %v338 = vlaneseq
  %v339 = vshrl.u32 %v338, 7
  %v340 = vsub.s32 %v337, %v339
  %v341 = vrot.slane %v186, %v340
  %vm342 = vcmask 851712
  %v343 = vsel %vm342, %v341, %v336
  %v344 = vadd.s32 %v255, 4294967192
  %v345 = vlaneseq
  %v346 = vshrl.u32 %v345, 7
  %v347 = vsub.s32 %v344, %v346
  %v348 = vrot.slane %v187, %v347
  %vm349 = vcmask 917312
  %v350 = vsel %vm349, %v348, %v343
  %v351 = vadd.s32 %v255, 4294967184
  %v352 = vlaneseq
  %v353 = vshrl.u32 %v352, 7
  %v354 = vsub.s32 %v351, %v353
  %v355 = vrot.slane %v188, %v354
  %vm356 = vcmask 982912
  %v357 = vsel %vm356, %v355, %v350
  %v358 = vadd.s32 %v255, 4294967176
  %v359 = vlaneseq
  %v360 = vshrl.u32 %v359, 7
  %v361 = vsub.s32 %v358, %v360
  %v362 = vrot.slane %v189, %v361
  %vm363 = vcmask 1048512
  %v364 = vsel %vm363, %v362, %v357
  %v365 = vlaneseq
  %v366 = vshrl.u32 %v365, 7
  %v367 = vsub.s32 %v255, %v366
  %v368 = vrot.slane %v190, %v367
  %v369 = vlaneseq
  %v370 = vshrl.u32 %v369, 7
  %v371 = vsub.s32 %v260, %v370
  %v372 = vrot.slane %v191, %v371
  %v373 = vsel %vm265, %v372, %v368
  %v374 = vlaneseq
  %v375 = vshrl.u32 %v374, 7
  %v376 = vsub.s32 %v267, %v375
  %v377 = vrot.slane %v192, %v376
  %v378 = vsel %vm272, %v377, %v373
  %v379 = vlaneseq
  %v380 = vshrl.u32 %v379, 7
  %v381 = vsub.s32 %v274, %v380
  %v382 = vrot.slane %v193, %v381
  %v383 = vsel %vm279, %v382, %v378
  %v384 = vlaneseq
  %v385 = vshrl.u32 %v384, 7
  %v386 = vsub.s32 %v281, %v385
  %v387 = vrot.slane %v194, %v386
  %v388 = vsel %vm286, %v387, %v383
  %v389 = vlaneseq
  %v390 = vshrl.u32 %v389, 7
  %v391 = vsub.s32 %v288, %v390
  %v392 = vrot.slane %v195, %v391
  %v393 = vsel %vm293, %v392, %v388
  %v394 = vlaneseq
  %v395 = vshrl.u32 %v394, 7
  %v396 = vsub.s32 %v295, %v395
  %v397 = vrot.slane %v196, %v396
  %v398 = vsel %vm300, %v397, %v393
  %v399 = vlaneseq
  %v400 = vshrl.u32 %v399, 7
  %v401 = vsub.s32 %v302, %v400
  %v402 = vrot.slane %v197, %v401
  %v403 = vsel %vm307, %v402, %v398
  %v404 = vlaneseq
  %v405 = vshrl.u32 %v404, 7
  %v406 = vsub.s32 %v309, %v405
  %v407 = vrot.slane %v198, %v406
  %v408 = vsel %vm314, %v407, %v403
  %v409 = vlaneseq
  %v410 = vshrl.u32 %v409, 7
  %v411 = vsub.s32 %v316, %v410
  %v412 = vrot.slane %v199, %v411
  %v413 = vsel %vm321, %v412, %v408
  %v414 = vlaneseq
  %v415 = vshrl.u32 %v414, 7
  %v416 = vsub.s32 %v323, %v415
  %v417 = vrot.slane %v200, %v416
  %v418 = vsel %vm328, %v417, %v413
  %v419 = vlaneseq
  %v420 = vshrl.u32 %v419, 7
  %v421 = vsub.s32 %v330, %v420
  %v422 = vrot.slane %v201, %v421
  %v423 = vsel %vm335, %v422, %v418
  %v424 = vlaneseq
  %v425 = vshrl.u32 %v424, 7
  %v426 = vsub.s32 %v337, %v425
  %v427 = vrot.slane %v202, %v426
  %v428 = vsel %vm342, %v427, %v423
  %v429 = vlaneseq
  %v430 = vshrl.u32 %v429, 7
  %v431 = vsub.s32 %v344, %v430
  %v432 = vrot.slane %v203, %v431
  %v433 = vsel %vm349, %v432, %v428
  %v434 = vlaneseq
  %v435 = vshrl.u32 %v434, 7
  %v436 = vsub.s32 %v351, %v435
  %v437 = vrot.slane %v204, %v436
  %v438 = vsel %vm356, %v437, %v433
  %v439 = vlaneseq
  %v440 = vshrl.u32 %v439, 7
  %v441 = vsub.s32 %v358, %v440
  %v442 = vrot.slane %v205, %v441
  %v443 = vsel %vm363, %v442, %v438
  %vm444 = vcmask 1041409
  %v445 = vsel %vm444, %v443, %v364
  %447 = vmatprep.subr.mxu0 0.0
  %448 = vmatpush1.msra.mxu0 %v206
  %449 = vmatprep.subr.mxu0 0.0
  %450 = vmatpush1.msra.mxu0 %v207
  %451 = vmatprep.subr.mxu0 0.0
  %452 = vmatpush1.msra.mxu0 %v208
  %453 = vmatprep.subr.mxu0 0.0
  %454 = vmatpush1.msra.mxu0 %v209
  %455 = vmatprep.subr.mxu0 0.0
  %456 = vmatpush1.msra.mxu0 %v210
  %457 = vmatprep.subr.mxu0 0.0
  %458 = vmatpush1.msra.mxu0 %v211
  %459 = vmatprep.subr.mxu0 0.0
  %460 = vmatpush1.msra.mxu0 %v212
  %461 = vmatprep.subr.mxu0 0.0
  %462 = vmatpush1.msra.mxu0 %v213
  %463 = vmatprep.subr.mxu0 0.0
  %464 = vmatpush1.msra.mxu0 %v214
  %465 = vmatprep.subr.mxu0 0.0
  %466 = vmatpush1.msra.mxu0 %v215
  %467 = vmatprep.subr.mxu0 0.0
  %468 = vmatpush1.msra.mxu0 %v216
  %469 = vmatprep.subr.mxu0 0.0
  %470 = vmatpush1.msra.mxu0 %v217
  %471 = vmatprep.subr.mxu0 0.0
  %472 = vmatpush1.msra.mxu0 %v218
  %473 = vmatprep.subr.mxu0 0.0
  %474 = vmatpush1.msra.mxu0 %v219
  %475 = vmatprep.subr.mxu0 0.0
  %476 = vmatpush1.msra.mxu0 %v220
  %477 = vmatprep.subr.mxu0 0.0
  %478 = vmatpush1.msra.mxu0 %v221
  %479 = vmatprep.subr.mxu0 0.0
  %480 = vmatpush1.msra.mxu0 0.0
  %481 = vmatprep.subr.mxu0 0.0
  %482 = vmatpush1.msra.mxu0 0.0
  %483 = vmatprep.subr.mxu0 0.0
  %484 = vmatpush1.msra.mxu0 0.0
  %485 = vmatprep.subr.mxu0 0.0
  %486 = vmatpush1.msra.mxu0 0.0
  %487 = vmatprep.subr.mxu0 0.0
  %488 = vmatpush1.msra.mxu0 0.0
  %489 = vmatprep.subr.mxu0 0.0
  %490 = vmatpush1.msra.mxu0 0.0
  %491 = vmatprep.subr.mxu0 0.0
  %492 = vmatpush1.msra.mxu0 0.0
  %493 = vmatprep.subr.mxu0 0.0
  %494 = vmatpush1.msra.mxu0 0.0
  %495 = vmatprep.subr.mxu0 0.0
  %496 = vmatpush1.msra.mxu0 0.0
  %497 = vmatprep.subr.mxu0 0.0
  %498 = vmatpush1.msra.mxu0 0.0
  %499 = vmatprep.subr.mxu0 0.0
  %500 = vmatpush1.msra.mxu0 0.0
  %501 = vmatprep.subr.mxu0 0.0
  %502 = vmatpush1.msra.mxu0 0.0
  %503 = vmatprep.subr.mxu0 0.0
  %504 = vmatpush1.msra.mxu0 0.0
  %505 = vmatprep.subr.mxu0 0.0
  %506 = vmatpush1.msra.mxu0 0.0
  %507 = vmatprep.subr.mxu0 0.0
  %508 = vmatpush1.msra.mxu0 0.0
  %509 = vmatprep.subr.mxu0 0.0
  %510 = vmatpush1.msra.mxu0 0.0
  %511 = vmatprep.mubr.f32.mxu0 0.0
  %512 = vmatmul.mubr.f32.gmra.mrb[0].mxu0 %v445
  %v513 = vpop.f32.mrb[0].mxu0
  %v514 = vadd.f32 0.0, %v513
  %v515 = vpop.f32.mrb[0].mxu0
  %516 = vdwg.mxu0
  %v517 = vmax.f32 %v514, 0.0
  %v518 = vld [vmem:[%s2] sm:$0xff]
  %vm519 = vcmask 64512
  %v521 = vsel %vm519, %v517, 0
  %523 = vmatprep.subr.mxu0 0.0
  %524 = vmatpush1.msra.mxu0 %v518
  %525 = vmatprep.subr.mxu0 0.0
  %526 = vmatpush1.msra.mxu0 0.0
  %527 = vmatprep.subr.mxu0 0.0
  %528 = vmatpush1.msra.mxu0 0.0
  %529 = vmatprep.subr.mxu0 0.0
  %530 = vmatpush1.msra.mxu0 0.0
  %531 = vmatprep.subr.mxu0 0.0
  %532 = vmatpush1.msra.mxu0 0.0
  %533 = vmatprep.subr.mxu0 0.0
  %534 = vmatpush1.msra.mxu0 0.0
  %535 = vmatprep.subr.mxu0 0.0
  %536 = vmatpush1.msra.mxu0 0.0
  %537 = vmatprep.subr.mxu0 0.0
  %538 = vmatpush1.msra.mxu0 0.0
  %539 = vmatprep.subr.mxu0 0.0
  %540 = vmatpush1.msra.mxu0 0.0
  %541 = vmatprep.subr.mxu0 0.0
  %542 = vmatpush1.msra.mxu0 0.0
  %543 = vmatprep.subr.mxu0 0.0
  %544 = vmatpush1.msra.mxu0 0.0
  %545 = vmatprep.subr.mxu0 0.0
  %546 = vmatpush1.msra.mxu0 0.0
  %547 = vmatprep.subr.mxu0 0.0
  %548 = vmatpush1.msra.mxu0 0.0
  %549 = vmatprep.subr.mxu0 0.0
  %550 = vmatpush1.msra.mxu0 0.0
  %551 = vmatprep.subr.mxu0 0.0
  %552 = vmatpush1.msra.mxu0 0.0
  %553 = vmatprep.subr.mxu0 0.0
  %554 = vmatpush1.msra.mxu0 0.0
  %555 = vmatprep.subr.mxu0 0.0
  %556 = vmatpush1.msra.mxu0 0.0
  %557 = vmatprep.subr.mxu0 0.0
  %558 = vmatpush1.msra.mxu0 0.0
  %559 = vmatprep.subr.mxu0 0.0
  %560 = vmatpush1.msra.mxu0 0.0
  %561 = vmatprep.subr.mxu0 0.0
  %562 = vmatpush1.msra.mxu0 0.0
  %563 = vmatprep.subr.mxu0 0.0
  %564 = vmatpush1.msra.mxu0 0.0
  %565 = vmatprep.subr.mxu0 0.0
  %566 = vmatpush1.msra.mxu0 0.0
  %567 = vmatprep.subr.mxu0 0.0
  %568 = vmatpush1.msra.mxu0 0.0
  %569 = vmatprep.subr.mxu0 0.0
  %570 = vmatpush1.msra.mxu0 0.0
  %571 = vmatprep.subr.mxu0 0.0
  %572 = vmatpush1.msra.mxu0 0.0
  %573 = vmatprep.subr.mxu0 0.0
  %574 = vmatpush1.msra.mxu0 0.0
  %575 = vmatprep.subr.mxu0 0.0
  %576 = vmatpush1.msra.mxu0 0.0
  %577 = vmatprep.subr.mxu0 0.0
  %578 = vmatpush1.msra.mxu0 0.0
  %579 = vmatprep.subr.mxu0 0.0
  %580 = vmatpush1.msra.mxu0 0.0
  %581 = vmatprep.subr.mxu0 0.0
  %582 = vmatpush1.msra.mxu0 0.0
  %583 = vmatprep.subr.mxu0 0.0
  %584 = vmatpush1.msra.mxu0 0.0
  %585 = vmatprep.subr.mxu0 0.0
  %586 = vmatpush1.msra.mxu0 0.0
  %587 = vmatprep.mubr.f32.mxu0 0.0
  %588 = vmatmul.mubr.f32.gmra.mrb[0].mxu0 %v521
  %v589 = vpop.f32.mrb[0].mxu0
  %v590 = vadd.f32 0.0, %v589
  %v591 = vpop.f32.mrb[0].mxu0
  %592 = vdwg.mxu0
  %v593 = vxor.u32 %v590, 2147483648
  %v594 = vmul.f32 %v593, 1.442695
  %v595 = vpow.pop %v594
  %v596 = vadd.f32 %v595, 1.0
  %v597 = vrcp.pop %v596
  %v598 = vmul.f32 1.0, %v597
  %v599 = vlaneseq
  %v600 = vshrl.u32 %v599, 7
  %v601 = vsub.s32 0, %v600
  %v602 = vrot.slane %v598, %v601
  %604 = vbcast.lane.b32.xlu0 %v602, 256
  %v605 = vpop.permute.xlu0 %604
  %s607 = sor.u32 256, 8
  %608 = vbcast.lane.b32.xlu0 %v602, %s607
  %v609 = vpop.permute.xlu0 %608
  %s611 = sor.u32 256, 16
  %612 = vbcast.lane.b32.xlu0 %v602, %s611
  %v613 = vpop.permute.xlu0 %612
  %s615 = sor.u32 256, 24
  %616 = vbcast.lane.b32.xlu0 %v602, %s615
  %v617 = vpop.permute.xlu0 %616
  %s619 = sor.u32 256, 32
  %620 = vbcast.lane.b32.xlu0 %v602, %s619
  %v621 = vpop.permute.xlu0 %620
  %s623 = sor.u32 256, 40
  %624 = vbcast.lane.b32.xlu0 %v602, %s623
  %v625 = vpop.permute.xlu0 %624
  %s627 = sor.u32 256, 48
  %628 = vbcast.lane.b32.xlu0 %v602, %s627
  %v629 = vpop.permute.xlu0 %628
  %s631 = sor.u32 256, 56
  %632 = vbcast.lane.b32.xlu0 %v602, %s631
  %v633 = vpop.permute.xlu0 %632
  %s635 = sor.u32 256, 64
  %636 = vbcast.lane.b32.xlu0 %v602, %s635
  %v637 = vpop.permute.xlu0 %636
  %s639 = sor.u32 256, 72
  %640 = vbcast.lane.b32.xlu0 %v602, %s639
  %v641 = vpop.permute.xlu0 %640
  %s643 = sor.u32 256, 80
  %644 = vbcast.lane.b32.xlu0 %v602, %s643
  %v645 = vpop.permute.xlu0 %644
  %s647 = sor.u32 256, 88
  %648 = vbcast.lane.b32.xlu0 %v602, %s647
  %v649 = vpop.permute.xlu0 %648
  %s651 = sor.u32 256, 96
  %652 = vbcast.lane.b32.xlu0 %v602, %s651
  %v653 = vpop.permute.xlu0 %652
  %s655 = sor.u32 256, 104
  %656 = vbcast.lane.b32.xlu0 %v602, %s655
  %v657 = vpop.permute.xlu0 %656
  %s659 = sor.u32 256, 112
  %660 = vbcast.lane.b32.xlu0 %v602, %s659
  %v661 = vpop.permute.xlu0 %660
  %s663 = sor.u32 256, 120
  %664 = vbcast.lane.b32.xlu0 %v602, %s663
  %v665 = vpop.permute.xlu0 %664
  %v666 = vlaneseq
  %v667 = vshrl.u32 %v666, 7
  %v668 = vsub.s32 1, %v667
  %v669 = vrot.slane %v598, %v668
  %671 = vbcast.lane.b32.xlu0 %v669, 256
  %v672 = vpop.permute.xlu0 %671
  %s674 = sor.u32 256, 8
  %675 = vbcast.lane.b32.xlu0 %v669, %s674
  %v676 = vpop.permute.xlu0 %675
  %s678 = sor.u32 256, 16
  %679 = vbcast.lane.b32.xlu0 %v669, %s678
  %v680 = vpop.permute.xlu0 %679
  %s682 = sor.u32 256, 24
  %683 = vbcast.lane.b32.xlu0 %v669, %s682
  %v684 = vpop.permute.xlu0 %683
  %s686 = sor.u32 256, 32
  %687 = vbcast.lane.b32.xlu0 %v669, %s686
  %v688 = vpop.permute.xlu0 %687
  %s690 = sor.u32 256, 40
  %691 = vbcast.lane.b32.xlu0 %v669, %s690
  %v692 = vpop.permute.xlu0 %691
  %s694 = sor.u32 256, 48
  %695 = vbcast.lane.b32.xlu0 %v669, %s694
  %v696 = vpop.permute.xlu0 %695
  %s698 = sor.u32 256, 56
  %699 = vbcast.lane.b32.xlu0 %v669, %s698
  %v700 = vpop.permute.xlu0 %699
  %s702 = sor.u32 256, 64
  %703 = vbcast.lane.b32.xlu0 %v669, %s702
  %v704 = vpop.permute.xlu0 %703
  %s706 = sor.u32 256, 72
  %707 = vbcast.lane.b32.xlu0 %v669, %s706
  %v708 = vpop.permute.xlu0 %707
  %s710 = sor.u32 256, 80
  %711 = vbcast.lane.b32.xlu0 %v669, %s710
  %v712 = vpop.permute.xlu0 %711
  %s714 = sor.u32 256, 88
  %715 = vbcast.lane.b32.xlu0 %v669, %s714
  %v716 = vpop.permute.xlu0 %715
  %s718 = sor.u32 256, 96
  %719 = vbcast.lane.b32.xlu0 %v669, %s718
  %v720 = vpop.permute.xlu0 %719
  %s722 = sor.u32 256, 104
  %723 = vbcast.lane.b32.xlu0 %v669, %s722
  %v724 = vpop.permute.xlu0 %723
  %s726 = sor.u32 256, 112
  %727 = vbcast.lane.b32.xlu0 %v669, %s726
  %v728 = vpop.permute.xlu0 %727
  %s730 = sor.u32 256, 120
  %731 = vbcast.lane.b32.xlu0 %v669, %s730
  %v732 = vpop.permute.xlu0 %731
  %v733 = vmul.f32 %v14, %v605
  %v734 = vmul.f32 %v15, %v605
  %v735 = vmul.f32 %v16, %v609
  %v736 = vmul.f32 %v17, %v609
  %v737 = vmul.f32 %v18, %v613
  %v738 = vmul.f32 %v19, %v613
  %v739 = vmul.f32 %v20, %v617
  %v740 = vmul.f32 %v21, %v617
  %v741 = vmul.f32 %v22, %v621
  %v742 = vmul.f32 %v23, %v621
  %v743 = vmul.f32 %v24, %v625
  %v744 = vmul.f32 %v25, %v625
  %v745 = vmul.f32 %v26, %v629
  %v746 = vmul.f32 %v27, %v629
  %v747 = vmul.f32 %v28, %v633
  %v748 = vmul.f32 %v29, %v633
  %v749 = vmul.f32 %v30, %v637
  %v750 = vmul.f32 %v31, %v637
  %v751 = vmul.f32 %v32, %v641
  %v752 = vmul.f32 %v33, %v641
  %v753 = vmul.f32 %v34, %v645
  %v754 = vmul.f32 %v35, %v645
  %v755 = vmul.f32 %v36, %v649
  %v756 = vmul.f32 %v37, %v649
  %v757 = vmul.f32 %v38, %v653
  %v758 = vmul.f32 %v39, %v653
  %v759 = vmul.f32 %v40, %v657
  %v760 = vmul.f32 %v41, %v657
  %v761 = vmul.f32 %v42, %v661
  %v762 = vmul.f32 %v43, %v661
  %v763 = vmul.f32 %v44, %v665
  %v764 = vmul.f32 %v45, %v665
  %v765 = vmul.f32 %v46, %v672
  %v766 = vmul.f32 %v47, %v672
  %v767 = vmul.f32 %v48, %v676
  %v768 = vmul.f32 %v49, %v676
  %v769 = vmul.f32 %v50, %v680
  %v770 = vmul.f32 %v51, %v680
  %v771 = vmul.f32 %v52, %v684
  %v772 = vmul.f32 %v53, %v684
  %v773 = vmul.f32 %v54, %v688
  %v774 = vmul.f32 %v55, %v688
  %v775 = vmul.f32 %v56, %v692
  %v776 = vmul.f32 %v57, %v692
  %v777 = vmul.f32 %v58, %v696
  %v778 = vmul.f32 %v59, %v696
  %v779 = vmul.f32 %v60, %v700
  %v780 = vmul.f32 %v61, %v700
  %v781 = vmul.f32 %v62, %v704
  %v782 = vmul.f32 %v63, %v704
  %v783 = vmul.f32 %v64, %v708
  %v784 = vmul.f32 %v65, %v708
  %v785 = vmul.f32 %v66, %v712
  %v786 = vmul.f32 %v67, %v712
  %v787 = vmul.f32 %v68, %v716
  %v788 = vmul.f32 %v69, %v716
  %v789 = vmul.f32 %v70, %v720
  %v790 = vmul.f32 %v71, %v720
  %v791 = vmul.f32 %v72, %v724
  %v792 = vmul.f32 %v73, %v724
  %v793 = vmul.f32 %v74, %v728
  %v794 = vmul.f32 %v75, %v728
  %v795 = vmul.f32 %v76, %v732
  %v796 = vmul.f32 %v77, %v732
  %797 = vst [vmem:[%s3] sm:$0xff] %v733
  %798 = vst [vmem:[%s3 + $0x8] sm:$0xff] %v734
  %799 = vst [vmem:[%s3 + $0x10] sm:$0xff] %v735
  %800 = vst [vmem:[%s3 + $0x18] sm:$0xff] %v736
  %801 = vst [vmem:[%s3 + $0x20] sm:$0xff] %v737
  %802 = vst [vmem:[%s3 + $0x28] sm:$0xff] %v738
  %803 = vst [vmem:[%s3 + $0x30] sm:$0xff] %v739
  %804 = vst [vmem:[%s3 + $0x38] sm:$0xff] %v740
  %805 = vst [vmem:[%s3 + $0x40] sm:$0xff] %v741
  %806 = vst [vmem:[%s3 + $0x48] sm:$0xff] %v742
  %807 = vst [vmem:[%s3 + $0x50] sm:$0xff] %v743
  %808 = vst [vmem:[%s3 + $0x58] sm:$0xff] %v744
  %809 = vst [vmem:[%s3 + $0x60] sm:$0xff] %v745
  %810 = vst [vmem:[%s3 + $0x68] sm:$0xff] %v746
  %811 = vst [vmem:[%s3 + $0x70] sm:$0xff] %v747
  %812 = vst [vmem:[%s3 + $0x78] sm:$0xff] %v748
  %813 = vst [vmem:[%s3 + $0x80] sm:$0xff] %v749
  %814 = vst [vmem:[%s3 + $0x88] sm:$0xff] %v750
  %815 = vst [vmem:[%s3 + $0x90] sm:$0xff] %v751
  %816 = vst [vmem:[%s3 + $0x98] sm:$0xff] %v752
  %817 = vst [vmem:[%s3 + $0xa0] sm:$0xff] %v753
  %818 = vst [vmem:[%s3 + $0xa8] sm:$0xff] %v754
  %819 = vst [vmem:[%s3 + $0xb0] sm:$0xff] %v755
  %820 = vst [vmem:[%s3 + $0xb8] sm:$0xff] %v756
  %821 = vst [vmem:[%s3 + $0xc0] sm:$0xff] %v757
  %822 = vst [vmem:[%s3 + $0xc8] sm:$0xff] %v758
  %823 = vst [vmem:[%s3 + $0xd0] sm:$0xff] %v759
  %824 = vst [vmem:[%s3 + $0xd8] sm:$0xff] %v760
  %825 = vst [vmem:[%s3 + $0xe0] sm:$0xff] %v761
  %826 = vst [vmem:[%s3 + $0xe8] sm:$0xff] %v762
  %827 = vst [vmem:[%s3 + $0xf0] sm:$0xff] %v763
  %828 = vst [vmem:[%s3 + $0xf8] sm:$0xff] %v764
  %829 = vst [vmem:[%s3 + $0x100] sm:$0xff] %v765
  %830 = vst [vmem:[%s3 + $0x108] sm:$0xff] %v766
  %831 = vst [vmem:[%s3 + $0x110] sm:$0xff] %v767
  %832 = vst [vmem:[%s3 + $0x118] sm:$0xff] %v768
  %833 = vst [vmem:[%s3 + $0x120] sm:$0xff] %v769
  %834 = vst [vmem:[%s3 + $0x128] sm:$0xff] %v770
  %835 = vst [vmem:[%s3 + $0x130] sm:$0xff] %v771
  %836 = vst [vmem:[%s3 + $0x138] sm:$0xff] %v772
  %837 = vst [vmem:[%s3 + $0x140] sm:$0xff] %v773
  %838 = vst [vmem:[%s3 + $0x148] sm:$0xff] %v774
  %839 = vst [vmem:[%s3 + $0x150] sm:$0xff] %v775
  %840 = vst [vmem:[%s3 + $0x158] sm:$0xff] %v776
  %841 = vst [vmem:[%s3 + $0x160] sm:$0xff] %v777
  %842 = vst [vmem:[%s3 + $0x168] sm:$0xff] %v778
  %843 = vst [vmem:[%s3 + $0x170] sm:$0xff] %v779
  %844 = vst [vmem:[%s3 + $0x178] sm:$0xff] %v780
  %845 = vst [vmem:[%s3 + $0x180] sm:$0xff] %v781
  %846 = vst [vmem:[%s3 + $0x188] sm:$0xff] %v782
  %847 = vst [vmem:[%s3 + $0x190] sm:$0xff] %v783
  %848 = vst [vmem:[%s3 + $0x198] sm:$0xff] %v784
  %849 = vst [vmem:[%s3 + $0x1a0] sm:$0xff] %v785
  %850 = vst [vmem:[%s3 + $0x1a8] sm:$0xff] %v786
  %851 = vst [vmem:[%s3 + $0x1b0] sm:$0xff] %v787
  %852 = vst [vmem:[%s3 + $0x1b8] sm:$0xff] %v788
  %853 = vst [vmem:[%s3 + $0x1c0] sm:$0xff] %v789
  %854 = vst [vmem:[%s3 + $0x1c8] sm:$0xff] %v790
  %855 = vst [vmem:[%s3 + $0x1d0] sm:$0xff] %v791
  %856 = vst [vmem:[%s3 + $0x1d8] sm:$0xff] %v792
  %857 = vst [vmem:[%s3 + $0x1e0] sm:$0xff] %v793
  %858 = vst [vmem:[%s3 + $0x1e8] sm:$0xff] %v794
  %859 = vst [vmem:[%s3 + $0x1f0] sm:$0xff] %v795
  %860 = vst [vmem:[%s3 + $0x1f8] sm:$0xff] %v796
  // Predicated region
  $region14: #{se_attention.1} parent=0 // pred_check
    _
  $region15: #{se_attention.1} parent=0 // pred_check_branch
    %862 = sbr.rel (0) target = $region17
  $region16: #{se_attention.1} parent=0 // pred_region
    _
  $region17: #{se_attention.1} parent=0 // pred_fallthru
    _
  // Predicated region
  $region18: #{se_attention.1} parent=0 // pred_check
    _
  $region19: #{se_attention.1} parent=0 // pred_check_branch
    %864 = sbr.rel (0) target = $region21
  $region20: #{se_attention.1} parent=0 // pred_region
    _
  $region21: #{se_attention.1} parent=0 // pred_fallthru
    _

</llo_original>
